<compile_context>
chip_gen: v5e
topology: v5e:2x2
jax: 0.10.0
libtpu: 0.0.40
codegen_flags: <defaults>
</compile_context>

<pallas_src>
import jax
import jax.numpy as jnp
from jax.experimental import pallas as pl
from jax.experimental.pallas import tpu as pltpu

FEATURE_DIM = 2
LANE = 128
SUBLANE = 8
DEFAULT_TILE_ROWS = 2048  # (2048, 128) f32 tile = 1 MiB; ~4 MiB live (2 bufs in+out)


def _round_up(x, m):
    return ((x + m - 1) // m) * m


def linear_kernel(x_ref, wpat_ref, b_ref, o_ref):
    """Even lanes of o get  x_f0*w0 + x_f1*w1 + b  for one sample each.

    x_ref:    (TILE_ROWS, 128) f32 VMEM — flat row-major X; even lanes = feature 0,
              odd lanes = feature 1 (64 samples per 128-lane row).
    wpat_ref: (1, 128) f32 VMEM — [w0, w1, w0, w1, ...] lane pattern.
    b_ref:    (1,) f32 SMEM — bias scalar.
    o_ref:    (TILE_ROWS, 128) f32 VMEM — even lanes valid, odd lanes ignored.
    """
    prod = x_ref[...] * wpat_ref[...]                 # VPU, sublane-broadcast of wpat
    # Rotate left by one lane (shift = LANE-1 == -1 mod 128): even lane i picks up
    # prod[i+1], i.e. the odd-lane partner of the same sample.  XLU slot.
    shifted = pltpu.roll(prod, shift=LANE - 1, axis=1)
    o_ref[...] = prod + shifted + b_ref[0]


def linear_forward(x, w, b, *, tile_rows=None):
    """x: (N, F) f32, w: (F, 1) f32, b: (1,) f32  ->  (N, 1) f32."""
    N, F = x.shape
    assert F == FEATURE_DIM
    x = x.astype(jnp.float32)

    n_elems = N * F                                   # flat, feature-interleaved
    rows = (n_elems + LANE - 1) // LANE

    if tile_rows is None:
        # Big tiles by default, but keep >= ~4 grid steps when N allows it
        # (v7x: 2 TensorCores * 2 steps each for double-buffered DMA).
        tile_rows = min(DEFAULT_TILE_ROWS,
                        max(SUBLANE, _round_up(-(-rows // 4), SUBLANE)))
    else:
        tile_rows = max(SUBLANE, _round_up(tile_rows, SUBLANE))

    rows_pad = _round_up(rows, tile_rows)
    grid_rows = rows_pad // tile_rows

    # Flat lane-dense view of X (no transpose, no full zero slab — pad tail only).
    flat = x.reshape(-1)
    if rows_pad * LANE != n_elems:
        flat = jnp.pad(flat, (0, rows_pad * LANE - n_elems))
    x2d = flat.reshape(rows_pad, LANE)

    # [w0, w1, w0, w1, ...] lane pattern (tiny, reused every grid step).
    w_flat = w.reshape(F).astype(jnp.float32)
    lane = jnp.arange(LANE, dtype=jnp.int32)
    wpat = jnp.where(lane % 2 == 0, w_flat[0], w_flat[1]).reshape(1, LANE)
    b_flat = b.reshape(1).astype(jnp.float32)

    out = pl.pallas_call(
        linear_kernel,
        out_shape=jax.ShapeDtypeStruct((rows_pad, LANE), jnp.float32),
        grid=(grid_rows,),
        in_specs=[
            pl.BlockSpec((tile_rows, LANE), lambda i: (i, 0)),      # X slab tile
            pl.BlockSpec((1, LANE), lambda i: (0, 0)),              # weight pattern
            pl.BlockSpec(memory_space=pltpu.MemorySpace.SMEM),      # bias scalar
        ],
        out_specs=pl.BlockSpec((tile_rows, LANE), lambda i: (i, 0)),
        compiler_params=pltpu.CompilerParams(
            dimension_semantics=("parallel",),   # shard N across TCs on v7x
        ),
        cost_estimate=pl.CostEstimate(
            flops=3 * rows_pad * LANE,           # mul + 2 adds per padded element
            transcendentals=0,
            bytes_accessed=2 * rows_pad * LANE * 4 + LANE * 4 + 4,
        ),
    )(x2d, wpat, b_flat)

    # Even lanes (= even flat positions) hold the per-sample results.
    return out.reshape(-1)[0:2 * N:2].reshape(N, 1)


if __name__ == "__main__":
    key = jax.random.PRNGKey(0)
    k_x, k_w, k_x2, k_x3 = jax.random.split(key, 4)

    # Deterministic parameter init mirroring the PyTorch module:
    #   w ~ N(0, 0.01) with shape (feature_dim, 1); b = ones(1)
    w = 0.01 * jax.random.normal(k_w, (FEATURE_DIM, 1), dtype=jnp.float32)
    b = jnp.ones((1,), dtype=jnp.float32)

    # Small shape consistent with the module's forward: X of (batch, feature_dim)
    batch = 8
    x = jax.random.normal(k_x, (batch, FEATURE_DIM), dtype=jnp.float32)
    out = jax.block_until_ready(linear_forward(x, w, b))
    ref = x @ w + b
    assert out.shape == (batch, 1)
    assert jnp.allclose(out, ref, atol=1e-5, rtol=1e-5), "mismatch vs reference"

    # Padded tail + multi-step grid (small forced tile).
    n2 = 1000
    x2 = jax.random.normal(k_x2, (n2, FEATURE_DIM), dtype=jnp.float32)
    out2 = jax.block_until_ready(linear_forward(x2, w, b, tile_rows=8))
    ref2 = x2 @ w + b
    assert out2.shape == (n2, 1)
    assert jnp.allclose(out2, ref2, atol=1e-5, rtol=1e-5), "mismatch vs reference (tiled)"

    # Default tile-size heuristic (auto tile, ~4 parallel grid steps).
    n3 = 4096
    x3 = jax.random.normal(k_x3, (n3, FEATURE_DIM), dtype=jnp.float32)
    out3 = jax.block_until_ready(linear_forward(x3, w, b))
    ref3 = x3 @ w + b
    assert out3.shape == (n3, 1)
    assert jnp.allclose(out3, ref3, atol=1e-5, rtol=1e-5), "mismatch vs reference (auto tile)"

    print("KERNEL_OK")
</pallas_src>

<mosaic_0001>
module attributes {stable_mosaic.version = 11 : i64} {
  func.func @linear_kernel(%arg0: i32, %arg1: memref<8x128xf32, #tpu.memory_space<vmem>>, %arg2: memref<1x128xf32, #tpu.memory_space<vmem>>, %arg3: memref<1xf32, #tpu.memory_space<smem>>, %arg4: memref<8x128xf32, #tpu.memory_space<vmem>>) attributes {dimension_semantics = [#tpu.dimension_semantics<parallel>], iteration_bounds = array<i64: 1>, scalar_prefetch = 0 : i64, scratch_operands = 0 : i64, tpu.core_type = #tpu.core_type<tc>, window_params = [{transform_indices = @transform_0, window_bounds = array<i64: 8, 128>}, {pipeline_mode = #tpu.pipeline_mode<synchronous>, transform_indices = @transform_1, window_bounds = array<i64: 1, 128>}, {transform_indices = @transform_2, window_bounds = array<i64: 1>}, {transform_indices = @transform_3, window_bounds = array<i64: 8, 128>}]} {
    %c0 = arith.constant 0 : index
    %c0_0 = arith.constant 0 : index
    %0 = vector.load %arg1[%c0, %c0_0] : memref<8x128xf32, #tpu.memory_space<vmem>>, vector<8x128xf32>
    %c0_1 = arith.constant 0 : index
    %c0_2 = arith.constant 0 : index
    %1 = vector.load %arg2[%c0_1, %c0_2] : memref<1x128xf32, #tpu.memory_space<vmem>>, vector<1x128xf32>
    %2 = vector.broadcast %1 : vector<1x128xf32> to vector<8x128xf32>
    %3 = arith.mulf %0, %2 : vector<8x128xf32>
    %c127_i32 = arith.constant 127 : i32
    %4 = tpu.dynamic_rotate %3 by %c127_i32 dim 1 : vector<8x128xf32>, i32 -> vector<8x128xf32>
    %5 = arith.addf %3, %4 : vector<8x128xf32>
    %c0_3 = arith.constant 0 : index
    %6 = memref.load %arg3[%c0_3] : memref<1xf32, #tpu.memory_space<smem>>
    %7 = vector.broadcast %6 : f32 to vector<8x128xf32>
    %8 = arith.addf %5, %7 : vector<8x128xf32>
    %c0_4 = arith.constant 0 : index
    %c0_5 = arith.constant 0 : index
    %9 = vector.load %arg4[%c0_4, %c0_5] : memref<8x128xf32, #tpu.memory_space<vmem>>, vector<8x128xf32>
    tpu.vector_store %arg4[%c0_4, %c0_5], %8 {strides = array<i32>} : memref<8x128xf32, #tpu.memory_space<vmem>>, vector<8x128xf32>,
    return
  }
  func.func @transform_0(%arg0: i32) -> (i32, i32) {
    %c0_i32 = arith.constant 0 : i32
    %c0_i32_0 = arith.constant 0 : i32
    return %arg0, %c0_i32 : i32, i32
  }
  func.func @transform_1(%arg0: i32) -> (i32, i32) {
    %c0_i32 = arith.constant 0 : i32
    %c0_i32_0 = arith.constant 0 : i32
    %c0_i32_1 = arith.constant 0 : i32
    return %c0_i32, %c0_i32_0 : i32, i32
  }
  func.func @transform_2(%arg0: i32) -> i32 {
    %c0_i32 = arith.constant 0 : i32
    %c0_i32_0 = arith.constant 0 : i32
    return %c0_i32 : i32
  }
  func.func @transform_3(%arg0: i32) -> (i32, i32) {
    %c0_i32 = arith.constant 0 : i32
    %c0_i32_0 = arith.constant 0 : i32
    return %arg0, %c0_i32 : i32, i32
  }
}

</mosaic_0001>

<llo_original>
// kernel: tpu_custom_call.1
$region0: #{tpu_custom_call.1}
  #allocation0 [shape = 'u32[]', space=smem, size = 0x4, offset = 0x4, fixed_abs, tag = 'smem constant byte address 0x4 - core index']
  #allocation1 [shape = 'u32[72,128]{1,0:T(1,128)}', space=vmem, size = 0x9000, scoped, tag = 'internal scratch']
  #allocation2 [shape = 'f32[1]{0:T(128)S(6)}', space=smem, size = 0x200, scoped, tag = 'scoped memory for tpu_custom_call.1']
  %s0 = inlined_call_operand.hbm [shape: f32[8,128], index: 0, kind: input, shape index: {}]
  %s1 = inlined_call_operand.vmem [shape: f32[1,128], index: 1, kind: input, shape index: {}]
  %s2 = inlined_call_operand.<no memory space> [shape: f32[1], index: 2, kind: input, shape index: {}]
  %s3 = inlined_call_operand.hbm [shape: f32[8,128], index: 3, kind: output, shape index: {}]
  %s4 = sld [smem:[#allocation0]]
  $region26: #{tpu_custom_call.1} parent=0
    _
  %s6 = ssub.s32 1, %s4
  %s7 = scalar_select 0, %s6, %s4
  %8 = sst [smem:[#allocation2]] %s2
  $region1: #{tpu_custom_call.1} parent=0
    #allocation3 [shape = 'u8[4096]{0}', space=vmem, size = 0x1000, scoped, tag = 'input window, operand 0, single buffered']
    #allocation4 [shape = 's32[1]{0}', space=sflag, size = 0x4, scoped, tag = 'scoped memory for tpu_custom_call.1']
    #allocation5 [shape = 's32[1]{0}', space=sflag, size = 0x4, scoped, tag = 'scoped memory for tpu_custom_call.1']
    #allocation6 [shape = 'u8[4096]{0}', space=vmem, size = 0x1000, scoped, tag = 'output window, operand 0, single buffered']
    %9 = vsyncpa [#allocation4], 0
    %10 = vsyncpa [#allocation5], 0
    // Predicated region
    $region2: #{tpu_custom_call.1} parent=1 // pred_check
      _
    $region3: #{tpu_custom_call.1} parent=1 // pred_check_branch
      %12 = sbr.rel (0) target = $region5
    $region4: #{tpu_custom_call.1} parent=1 // pred_region
      %14 = vsyncadd [#allocation4], 0
      %s16 = sshll.u32 %s0, 4
      %s17 = int_to_ptr.hbm [resolvable:$true] %s16
      %s18 = sshll.u32 [#allocation3], 4
      %s19 = int_to_ptr.vmem [resolvable:$true] %s18
      %21 = dma.hbm_to_vmem [thread:$0]  %s17, 128, %s19, [#allocation4]
    $region5: #{tpu_custom_call.1} parent=1 // pred_fallthru
      _
    // Predicated region
    $region6: #{tpu_custom_call.1} parent=1 // pred_check
      _
    $region7: #{tpu_custom_call.1} parent=1 // pred_check_branch
      %23 = sbr.rel (0) target = $region9
    $region8: #{tpu_custom_call.1} parent=1 // pred_region
      _
    $region9: #{tpu_custom_call.1} parent=1 // pred_fallthru
      _
    // Predicated region
    $region10: #{tpu_custom_call.1} parent=1 // pred_check
      _
    $region11: #{tpu_custom_call.1} parent=1 // pred_check_branch
      %25 = sbr.rel (0) target = $region13
    $region12: #{tpu_custom_call.1} parent=1 // pred_region
      _
    $region13: #{tpu_custom_call.1} parent=1 // pred_fallthru
      _
    // Predicated region
    $region14: #{tpu_custom_call.1} parent=1 // pred_check
      _
    $region15: #{tpu_custom_call.1} parent=1 // pred_check_branch
      %27 = sbr.rel (0) target = $region17
    $region16: #{tpu_custom_call.1} parent=1 // pred_region
      %29 = dma.done [#allocation4], 128
    $region17: #{tpu_custom_call.1} parent=1 // pred_fallthru
      _
    %v30 = vld [vmem:[#allocation3] sm:$0xff]
    %v31 = vld [vmem:[%s1] sm:$0x1]
    %v33 = vperm.slane %v31, 0
    %v35 = vmul.f32 %v30, %v33
    %36 = vrot.lane.b32.xlu0 %v35, 127
    %v37 = vpop.permute.xlu0 %36
    %v38 = vadd.f32 %v35, %v37
    %s39 = sld [smem:[#allocation2]]
    %v40 = vstv %s39
    %v41 = vadd.f32 %v38, %v40
    %42 = vst [vmem:[#allocation6] sm:$0xff] %v41
    // Predicated region
    $region18: #{tpu_custom_call.1} parent=1 // pred_check
      _
    $region19: #{tpu_custom_call.1} parent=1 // pred_check_branch
      %44 = sbr.rel (0) target = $region21
    $region20: #{tpu_custom_call.1} parent=1 // pred_region
      %46 = vsyncadd [#allocation5], 0
      %s48 = sshll.u32 [#allocation6], 4
      %s49 = int_to_ptr.vmem [resolvable:$true] %s48
      %s50 = sshll.u32 %s3, 4
      %s51 = int_to_ptr.hbm [resolvable:$true] %s50
      %53 = dma.vmem_to_hbm [thread:$0]  %s49, 128, %s51, [#allocation5]
    $region21: #{tpu_custom_call.1} parent=1 // pred_fallthru
      _
    // Predicated region
    $region22: #{tpu_custom_call.1} parent=1 // pred_check
      _
    $region23: #{tpu_custom_call.1} parent=1 // pred_check_branch
      %55 = sbr.rel (0) target = $region25
    $region24: #{tpu_custom_call.1} parent=1 // pred_region
      %57 = dma.done [#allocation5], 128
    $region25: #{tpu_custom_call.1} parent=1 // pred_fallthru
      _
    %58 = vsyncpa [#allocation4], 1
    %59 = vsyncpa [#allocation5], 1

</llo_original>
